<compile_context>
chip_gen: v6e
topology: v6e:2x2x1
jax: 0.10.0
libtpu: 0.0.40
codegen_flags: <defaults>
</compile_context>

<pallas_src>
import math
from functools import partial

import jax
import jax.numpy as jnp
from jax import lax
from jax.experimental import pallas as pl
from jax.experimental.pallas import tpu as pltpu


def _round_up(x, m):
    return ((x + m - 1) // m) * m


def _vmem_limit_bytes(nbytes):
    # 2x headroom + 2 MiB slack, clamped to [16 MiB, 64 MiB] so the value is
    # valid on every chip (v7x has 64 MiB/TC physical VMEM).
    return int(min(64 << 20, max(16 << 20, 2 * nbytes + (2 << 20))))


# --------------------------------------------------------------------------- #
# One-shot K/V projection kernel (grid-invariant: runs once, not per patch tile)
# --------------------------------------------------------------------------- #
def _kv_proj_kernel(dm_pad, protos_ref, wkv_ref, bkv_ref, k_ref, v_ref):
    kv = (jnp.dot(protos_ref[...], wkv_ref[...],
                  preferred_element_type=jnp.float32) + bkv_ref[...])
    k_ref[...] = kv[:, :dm_pad].astype(k_ref.dtype)
    v_ref[...] = kv[:, dm_pad:].astype(v_ref.dtype)


# --------------------------------------------------------------------------- #
# Main multi-head cross-attention kernel (grid over the patch axis)
# --------------------------------------------------------------------------- #
def _attn_kernel(num_heads, d_pad, v_valid,
                 x_ref, k_ref, v_ref, wq_ref, bq_ref, wo_ref, bo_ref,
                 out_ref, attn_ref):
    x = x_ref[...]                                    # [tile_p, dm]    bf16
    k = k_ref[...]                                    # [Vp, dm_pad]    bf16
    v = v_ref[...]                                    # [Vp, dm_pad]    bf16
    vp = k.shape[0]

    # Q projection; 1/sqrt(d_head) already folded into wq/bq.
    q = (jnp.dot(x, wq_ref[...], preferred_element_type=jnp.float32)
         + bq_ref[...])                               # [tile_p, dm_pad] f32
    q = q.astype(k.dtype)

    # Additive mask for padded prototype columns (padded K rows carry bias).
    col = lax.broadcasted_iota(jnp.int32, (1, vp), 1)
    mask = jnp.where(col < v_valid, 0.0, -1e30).astype(jnp.float32)

    for h in range(num_heads):
        sl = slice(h * d_pad, (h + 1) * d_pad)        # 128-lane aligned slice
        qh = q[:, sl]
        kh = k[:, sl]
        vh = v[:, sl]

        # Contract last dims of both operands (no explicit transpose).
        scores = lax.dot_general(qh, kh, (((1,), (1,)), ((), ())),
                                 preferred_element_type=jnp.float32)
        scores = scores + mask
        scores = scores - jnp.max(scores, axis=-1, keepdims=True)
        p = jnp.exp(scores)
        denom = jnp.sum(p, axis=-1, keepdims=True)
        p = p * pl.reciprocal(denom, approx=False)

        head = jnp.dot(p.astype(vh.dtype), vh,
                       preferred_element_type=jnp.float32)   # [tile_p, d_pad]
        attn_ref[:, sl] = head.astype(attn_ref.dtype)         # aligned store

    # Single full-contraction out-projection into a lane-dense output block.
    out_ref[...] = (jnp.dot(attn_ref[...], wo_ref[...],
                            preferred_element_type=jnp.float32)
                    + bo_ref[...]).astype(out_ref.dtype)


def prototype_reprogrammer(patch_tokens, params, num_heads, *,
                           max_tile_p=1024, compute_dtype=jnp.bfloat16):
    P, dm = patch_tokens.shape
    V_prime, D = params["prototypes"].shape
    assert dm % num_heads == 0
    d_head = dm // num_heads
    scale = 1.0 / math.sqrt(d_head)

    # ---- Head-major, lane-aligned padded layout ----
    d_pad = _round_up(d_head, 128)          # each head occupies 128k lanes
    dm_pad = num_heads * d_pad
    D_pad = _round_up(max(D, 128), 128)
    Vp_pad = _round_up(max(V_prime, 128), 128)

    def head_pad_cols(w):                    # [fan_in, H*d] -> [fan_in, H*d_pad]
        fi = w.shape[0]
        w = w.reshape(fi, num_heads, d_head)
        w = jnp.pad(w, ((0, 0), (0, 0), (0, d_pad - d_head)))
        return w.reshape(fi, dm_pad)

    def head_pad_rows(w):                    # [H*d, fan_out] -> [H*d_pad, fan_out]
        fo = w.shape[1]
        w = w.reshape(num_heads, d_head, fo)
        w = jnp.pad(w, ((0, 0), (0, d_pad - d_head), (0, 0)))
        return w.reshape(dm_pad, fo)

    # Query projection: fold the 1/sqrt(d_head) scale into the weights (static).
    wq = (head_pad_cols(params["wq"]) * scale).astype(compute_dtype)
    bq = (head_pad_cols(params["bq"]) * scale).astype(jnp.float32)

    # Fused K|V projection operands (used once, below).
    wkv = jnp.concatenate([head_pad_cols(params["wk"]),
                           head_pad_cols(params["wv"])],
                          axis=1).astype(compute_dtype)
    bkv = jnp.concatenate([head_pad_cols(params["bk"]),
                           head_pad_cols(params["bv"])],
                          axis=1).astype(jnp.float32)

    # Out projection: head-padded rows, lane-dense (128-multiple) columns.
    wo = head_pad_rows(params["wo"])
    bo = params["bo"]
    if D_pad != D:
        wo = jnp.pad(wo, ((0, 0), (0, D_pad - D)))
        bo = jnp.pad(bo, ((0, 0), (0, D_pad - D)))
    wo = wo.astype(compute_dtype)
    bo = bo.astype(jnp.float32)

    protos = params["prototypes"]
    if Vp_pad != V_prime:
        protos = jnp.pad(protos, ((0, Vp_pad - V_prime), (0, 0)))
    protos = protos.astype(compute_dtype)

    # ---- Hoisted, grid-invariant K/V projection: one-shot pallas_call ----
    kv_bytes = (protos.size + wkv.size + 2 * Vp_pad * dm_pad) * 2 + bkv.size * 4
    k, v = pl.pallas_call(
        partial(_kv_proj_kernel, dm_pad),
        out_shape=(jax.ShapeDtypeStruct((Vp_pad, dm_pad), compute_dtype),
                   jax.ShapeDtypeStruct((Vp_pad, dm_pad), compute_dtype)),
        compiler_params=pltpu.CompilerParams(
            vmem_limit_bytes=_vmem_limit_bytes(kv_bytes)),
    )(protos, wkv, bkv)

    # ---- Patch-axis tiling: minimize last-tile padding ----
    num_tiles = max(1, -(-P // max_tile_p))
    tile_p = _round_up(-(-P // num_tiles), 8)
    P_pad = num_tiles * tile_p
    x = patch_tokens
    if P_pad != P:
        x = jnp.pad(x, ((0, P_pad - P), (0, 0)))
    x = x.astype(compute_dtype)

    # Constant-index (VMEM-resident) weight specs: single-buffered.
    def const_spec(shape):
        nd = len(shape)
        return pl.BlockSpec(shape, lambda i: (0,) * nd,
                            pipeline_mode=pl.Buffered(1))

    # Advisory cost estimate for XLA scheduling around the custom call.
    flops = num_tiles * (
        2 * tile_p * dm * dm_pad                              # Q proj
        + num_heads * (4 * tile_p * d_pad * Vp_pad)           # scores + attn@V
        + 2 * tile_p * dm_pad * D_pad)                        # out proj
    transcendentals = num_tiles * num_heads * tile_p * Vp_pad  # exp
    bytes_accessed = (P_pad * dm * 2 + 2 * Vp_pad * dm_pad * 2
                      + dm * dm_pad * 2 + dm_pad * 4
                      + dm_pad * D_pad * 2 + D_pad * 4
                      + P_pad * D_pad * 4)

    # Explicit VMEM budget (resident weights single-buffered + 2x pipelined
    # x/out tiles + attention scratch).
    resident = ((2 * Vp_pad * dm_pad + dm * dm_pad + dm_pad * D_pad) * 2
                + (dm_pad + D_pad) * 4)
    pipelined = 2 * (tile_p * dm * 2 + tile_p * D_pad * 4)
    scratch = tile_p * dm_pad * 2
    vmem_needed = resident + pipelined + scratch

    kernel = partial(_attn_kernel, num_heads, d_pad, V_prime)

    out = pl.pallas_call(
        kernel,
        out_shape=jax.ShapeDtypeStruct((P_pad, D_pad), jnp.float32),
        grid=(num_tiles,),
        in_specs=[
            pl.BlockSpec((tile_p, dm), lambda i: (i, 0)),   # x (pipelined)
            const_spec((Vp_pad, dm_pad)),                   # K  (resident)
            const_spec((Vp_pad, dm_pad)),                   # V  (resident)
            const_spec((dm, dm_pad)),                       # wq (scale folded)
            const_spec((1, dm_pad)),                        # bq
            const_spec((dm_pad, D_pad)),                    # wo (lane-padded)
            const_spec((1, D_pad)),                         # bo
        ],
        out_specs=pl.BlockSpec((tile_p, D_pad), lambda i: (i, 0)),
        scratch_shapes=[pltpu.VMEM((tile_p, dm_pad), compute_dtype)],
        compiler_params=pltpu.CompilerParams(
            dimension_semantics=("parallel",),
            vmem_limit_bytes=_vmem_limit_bytes(vmem_needed)),
        cost_estimate=pl.CostEstimate(
            flops=int(flops),
            transcendentals=int(transcendentals),
            bytes_accessed=int(bytes_accessed)),
    )(x, k, v, wq, bq, wo, bo)

    return out[:P, :D]


def init_params(key, dm, D, V_prime):
    """Deterministic synthetic parameters (shapes follow the PyTorch module)."""
    ks = jax.random.split(key, 9)

    def linear(kw, kb, fan_in, fan_out):
        bound = 1.0 / math.sqrt(fan_in)
        W = jax.random.uniform(kw, (fan_in, fan_out), jnp.float32, -bound, bound)
        b = jax.random.uniform(kb, (1, fan_out), jnp.float32, -bound, bound)
        return W, b

    wq, bq = linear(ks[0], ks[1], dm, dm)   # query_proj: dm -> dm
    wk, bk = linear(ks[2], ks[3], D, dm)    # key_proj:   D  -> dm
    wv, bv = linear(ks[4], ks[5], D, dm)    # value_proj: D  -> dm
    wo, bo = linear(ks[6], ks[7], dm, D)    # out_proj:   dm -> D
    prototypes = jax.random.normal(ks[8], (V_prime, D), jnp.float32)
    return dict(wq=wq, bq=bq, wk=wk, bk=bk, wv=wv, bv=bv, wo=wo, bo=bo,
                prototypes=prototypes)


def reference_forward(patch_tokens, params, num_heads):
    """Pure-JAX reference mirroring the PyTorch forward exactly (f32)."""
    P, dm = patch_tokens.shape
    V_prime, D = params["prototypes"].shape
    d = dm // num_heads
    Q = patch_tokens @ params["wq"] + params["bq"][0]
    K = params["prototypes"] @ params["wk"] + params["bk"][0]
    V = params["prototypes"] @ params["wv"] + params["bv"][0]
    Q = Q.reshape(P, num_heads, d).transpose(1, 0, 2)
    K = K.reshape(V_prime, num_heads, d).transpose(1, 0, 2)
    V = V.reshape(V_prime, num_heads, d).transpose(1, 0, 2)
    scores = jnp.einsum("hpd,hvd->hpv", Q, K) / math.sqrt(d)
    attn = jax.nn.softmax(scores, axis=-1)
    out = jnp.einsum("hpv,hvd->hpd", attn, V)
    out = out.transpose(1, 0, 2).reshape(P, dm)
    return out @ params["wo"] + params["bo"][0]


if __name__ == "__main__":
    # Small, module-consistent shapes: P patch tokens of width dm attend over
    # V' prototypes living in a D-dim language-model space.
    P, dm, num_heads, V_prime, D = 8, 32, 4, 8, 32

    key = jax.random.PRNGKey(0)
    k_params, k_x = jax.random.split(key)
    params = init_params(k_params, dm, D, V_prime)
    patch_tokens = jax.random.normal(k_x, (P, dm), jnp.float32)

    out = prototype_reprogrammer(patch_tokens, params, num_heads)
    out = jax.block_until_ready(out)

    ref = reference_forward(patch_tokens, params, num_heads)
    assert out.shape == (P, D)
    # Tolerance accounts for bf16 MXU operands (f32 accumulation everywhere).
    assert jnp.allclose(out, ref, atol=2e-2, rtol=2e-2), "mismatch vs reference"

    print("KERNEL_OK")
</pallas_src>

<mosaic_0001>
module attributes {stable_mosaic.version = 11 : i64} {
  func.func @_kv_proj_kernel(%arg0: memref<128x32xbf16, #tpu.memory_space<vmem>>, %arg1: memref<32x1024xbf16, #tpu.memory_space<vmem>>, %arg2: memref<1x1024xf32, #tpu.memory_space<vmem>>, %arg3: memref<128x512xbf16, #tpu.memory_space<vmem>>, %arg4: memref<128x512xbf16, #tpu.memory_space<vmem>>) attributes {dimension_semantics = [], scalar_prefetch = 0 : i64, scratch_operands = 0 : i64, tpu.core_type = #tpu.core_type<tc>} {
    %c0 = arith.constant 0 : index
    %c0_0 = arith.constant 0 : index
    %0 = vector.load %arg0[%c0, %c0_0] : memref<128x32xbf16, #tpu.memory_space<vmem>>, vector<128x32xbf16>
    %c0_1 = arith.constant 0 : index
    %c0_2 = arith.constant 0 : index
    %1 = vector.load %arg1[%c0_1, %c0_2] : memref<32x1024xbf16, #tpu.memory_space<vmem>>, vector<32x1024xbf16>
    %cst = arith.constant dense<0.000000e+00> : vector<128x1024xf32>
    %2 = tpu.matmul %0, %1, %cst {dimension_numbers = #tpu.dot_dimension_numbers<[1], [0], [0], [1], [0, 0, 1, 1], [], []>} : vector<128x32xbf16>, vector<32x1024xbf16>, vector<128x1024xf32> -> vector<128x1024xf32>
    %c0_3 = arith.constant 0 : index
    %c0_4 = arith.constant 0 : index
    %3 = vector.load %arg2[%c0_3, %c0_4] : memref<1x1024xf32, #tpu.memory_space<vmem>>, vector<1x1024xf32>
    %4 = vector.broadcast %3 : vector<1x1024xf32> to vector<128x1024xf32>
    %5 = arith.addf %2, %4 : vector<128x1024xf32>
    %6 = vector.extract_strided_slice %5 {offsets = [0, 0], sizes = [128, 512], strides = [1, 1]} : vector<128x1024xf32> to vector<128x512xf32>
    %7 = arith.truncf %6 : vector<128x512xf32> to vector<128x512xbf16>
    %c0_5 = arith.constant 0 : index
    %c0_6 = arith.constant 0 : index
    %8 = vector.load %arg3[%c0_5, %c0_6] : memref<128x512xbf16, #tpu.memory_space<vmem>>, vector<128x512xbf16>
    tpu.vector_store %arg3[%c0_5, %c0_6], %7 {strides = array<i32>} : memref<128x512xbf16, #tpu.memory_space<vmem>>, vector<128x512xbf16>,
    %9 = vector.extract_strided_slice %5 {offsets = [0, 512], sizes = [128, 512], strides = [1, 1]} : vector<128x1024xf32> to vector<128x512xf32>
    %10 = arith.truncf %9 : vector<128x512xf32> to vector<128x512xbf16>
    %c0_7 = arith.constant 0 : index
    %c0_8 = arith.constant 0 : index
    %11 = vector.load %arg4[%c0_7, %c0_8] : memref<128x512xbf16, #tpu.memory_space<vmem>>, vector<128x512xbf16>
    tpu.vector_store %arg4[%c0_7, %c0_8], %10 {strides = array<i32>} : memref<128x512xbf16, #tpu.memory_space<vmem>>, vector<128x512xbf16>,
    return
  }
}

</mosaic_0001>

<llo_original>
// kernel: tpu_custom_call.1
$region0: #{tpu_custom_call.1}
  #allocation0 [shape = 'u32[]', space=smem, size = 0x4, offset = 0x4, fixed_abs, tag = 'smem constant byte address 0x4 - core index']
  #allocation1 [shape = 'u32[144,128]{1,0:T(1,128)}', space=vmem, size = 0x12000, scoped, tag = 'internal scratch']
  %s0 = inlined_call_operand.vmem [shape: bf16[128,32], index: 0, kind: input, shape index: {}]
  %s1 = inlined_call_operand.hbm [shape: bf16[32,1024], index: 1, kind: input, shape index: {}]
  %s2 = inlined_call_operand.vmem [shape: f32[1,1024], index: 2, kind: input, shape index: {}]
  %s3 = inlined_call_operand.hbm [shape: bf16[128,512], index: 3, kind: output, shape index: {0}]
  %s4 = inlined_call_operand.hbm [shape: bf16[128,512], index: 4, kind: output, shape index: {1}]
  %5 = xla_tuple %s3, %s4
  %s6 = sld [smem:[#allocation0]]
  $region34: #{tpu_custom_call.1} parent=0
    _
  %s8 = ssub.s32 1, %s6
  %s9 = scalar_select 0, %s8, %s6
  $region1: #{tpu_custom_call.1} parent=0
    #allocation2 [shape = 'u8[65536]{0}', space=vmem, size = 0x10000, scoped, tag = 'input window, operand 1, single buffered']
    #allocation3 [shape = 's32[1]{0}', space=sflag, size = 0x4, scoped, tag = 'scoped memory for tpu_custom_call.1']
    #allocation4 [shape = 's32[1]{0}', space=sflag, size = 0x4, scoped, tag = 'scoped memory for tpu_custom_call.1']
    #allocation5 [shape = 'u8[131072]{0}', space=vmem, size = 0x20000, scoped, tag = 'output window, operand 0, single buffered']
    #allocation6 [shape = 'u8[131072]{0}', space=vmem, size = 0x20000, scoped, tag = 'output window, operand 1, single buffered']
    #allocation7 [shape = 's32[1]{0}', space=sflag, size = 0x4, scoped, tag = 'scoped memory for tpu_custom_call.1']
    %10 = vsyncpa [#allocation3], 0
    %11 = vsyncpa [#allocation4], 0
    %12 = vsyncpa [#allocation7], 0
    // Predicated region
    $region2: #{tpu_custom_call.1} parent=1 // pred_check
      _
    $region3: #{tpu_custom_call.1} parent=1 // pred_check_branch
      %14 = sbr.rel (0) target = $region5
    $region4: #{tpu_custom_call.1} parent=1 // pred_region
      _
    $region5: #{tpu_custom_call.1} parent=1 // pred_fallthru
      _
    // Predicated region
    $region6: #{tpu_custom_call.1} parent=1 // pred_check
      _
    $region7: #{tpu_custom_call.1} parent=1 // pred_check_branch
      %16 = sbr.rel (0) target = $region9
    $region8: #{tpu_custom_call.1} parent=1 // pred_region
      %s18 = ssub.s32 2048, 2048
      %19 = vsyncadd [#allocation3], %s18
      %s20 = sshll.u32 [#allocation2], 4
      %s21 = int_to_ptr.vmem [resolvable:$true] %s20
      %26 = dma.hbm_to_vmem [thread:$0]  %s1, 2048, %s21, [#allocation3], 512, 512, 32
    $region9: #{tpu_custom_call.1} parent=1 // pred_fallthru
      _
    // Predicated region
    $region10: #{tpu_custom_call.1} parent=1 // pred_check
      _
    $region11: #{tpu_custom_call.1} parent=1 // pred_check_branch
      %28 = sbr.rel (0) target = $region13
    $region12: #{tpu_custom_call.1} parent=1 // pred_region
      _
    $region13: #{tpu_custom_call.1} parent=1 // pred_fallthru
      _
    // Predicated region
    $region14: #{tpu_custom_call.1} parent=1 // pred_check
      _
    $region15: #{tpu_custom_call.1} parent=1 // pred_check_branch
      %30 = sbr.rel (0) target = $region17
    $region16: #{tpu_custom_call.1} parent=1 // pred_region
      %31 = dma.done [#allocation3], 2048
    $region17: #{tpu_custom_call.1} parent=1 // pred_fallthru
      _
    %v33 = vld [vmem:[%s0] sm:$0xf]
    %v34 = vld [vmem:[%s0 + $0x4] sm:$0xf]
    %v35 = vld [vmem:[%s0 + $0x8] sm:$0xf]
    %v36 = vld [vmem:[%s0 + $0xc] sm:$0xf]
    %v37 = vld [vmem:[%s0 + $0x10] sm:$0xf]
    %v38 = vld [vmem:[%s0 + $0x14] sm:$0xf]
    %v39 = vld [vmem:[%s0 + $0x18] sm:$0xf]
    %v40 = vld [vmem:[%s0 + $0x1c] sm:$0xf]
    %v41 = vld [vmem:[%s0 + $0x20] sm:$0xf]
    %v42 = vld [vmem:[%s0 + $0x24] sm:$0xf]
    %v43 = vld [vmem:[%s0 + $0x28] sm:$0xf]
    %v44 = vld [vmem:[%s0 + $0x2c] sm:$0xf]
    %v45 = vld [vmem:[%s0 + $0x30] sm:$0xf]
    %v46 = vld [vmem:[%s0 + $0x34] sm:$0xf]
    %v47 = vld [vmem:[%s0 + $0x38] sm:$0xf]
    %v48 = vld [vmem:[%s0 + $0x3c] sm:$0xf]
    %v49 = vld [vmem:[#allocation2] sm:$0xff]
    %v50 = vld [vmem:[#allocation2 + $0x8] sm:$0xff]
    %v51 = vld [vmem:[#allocation2 + $0x10] sm:$0xff]
    %v52 = vld [vmem:[#allocation2 + $0x18] sm:$0xff]
    %v53 = vld [vmem:[#allocation2 + $0x20] sm:$0xff]
    %v54 = vld [vmem:[#allocation2 + $0x28] sm:$0xff]
    %v55 = vld [vmem:[#allocation2 + $0x30] sm:$0xff]
    %v56 = vld [vmem:[#allocation2 + $0x38] sm:$0xff]
    %v57 = vld [vmem:[#allocation2 + $0x40] sm:$0xff]
    %v58 = vld [vmem:[#allocation2 + $0x48] sm:$0xff]
    %v59 = vld [vmem:[#allocation2 + $0x50] sm:$0xff]
    %v60 = vld [vmem:[#allocation2 + $0x58] sm:$0xff]
    %v61 = vld [vmem:[#allocation2 + $0x60] sm:$0xff]
    %v62 = vld [vmem:[#allocation2 + $0x68] sm:$0xff]
    %v63 = vld [vmem:[#allocation2 + $0x70] sm:$0xff]
    %v64 = vld [vmem:[#allocation2 + $0x78] sm:$0xff]
    %v65 = vld [vmem:[%s2] sm:$0xff]
    %v67 = vlaneseq
    %v68 = vshrl.u32 %v67, 7
    %v69 = vsub.s32 0, %v68
    %v70 = vrot.slane %v65, %v69
    %v71 = vlaneseq
    %v72 = vshrl.u32 %v71, 7
    %v73 = vsub.s32 1, %v72
    %v74 = vrot.slane %v65, %v73
    %v75 = vlaneseq
    %v76 = vshrl.u32 %v75, 7
    %v77 = vsub.s32 2, %v76
    %v78 = vrot.slane %v65, %v77
    %v79 = vlaneseq
    %v80 = vshrl.u32 %v79, 7
    %v81 = vsub.s32 3, %v80
    %v82 = vrot.slane %v65, %v81
    %v83 = vlaneseq
    %v84 = vshrl.u32 %v83, 7
    %v85 = vsub.s32 4, %v84
    %v86 = vrot.slane %v65, %v85
    %v87 = vlaneseq
    %v88 = vshrl.u32 %v87, 7
    %v89 = vsub.s32 5, %v88
    %v90 = vrot.slane %v65, %v89
    %v91 = vlaneseq
    %v92 = vshrl.u32 %v91, 7
    %v93 = vsub.s32 6, %v92
    %v94 = vrot.slane %v65, %v93
    %v95 = vlaneseq
    %v96 = vshrl.u32 %v95, 7
    %v97 = vsub.s32 7, %v96
    %v98 = vrot.slane %v65, %v97
    %v123 = vunpack.c.l.b16 %v33
    %v124 = vunpack.c.l.b16 %v34
    %v125 = vunpack.c.l.b16 %v35
    %v126 = vunpack.c.l.b16 %v36
    %v127 = vunpack.c.l.b16 %v37
    %v128 = vunpack.c.l.b16 %v38
    %v129 = vunpack.c.l.b16 %v39
    %v130 = vunpack.c.l.b16 %v40
    %v131 = vunpack.c.l.b16 %v41
    %v132 = vunpack.c.l.b16 %v42
    %v133 = vunpack.c.l.b16 %v43
    %v134 = vunpack.c.l.b16 %v44
    %v135 = vunpack.c.l.b16 %v45
    %v136 = vunpack.c.l.b16 %v46
    %v137 = vunpack.c.l.b16 %v47
    %v138 = vunpack.c.l.b16 %v48
    %v139 = vpack.c.b16 %v124, %v123
    %v140 = vpack.c.b16 %v126, %v125
    %v141 = vpack.c.b16 %v128, %v127
    %v142 = vpack.c.b16 %v130, %v129
    %v143 = vpack.c.b16 %v132, %v131
    %v144 = vpack.c.b16 %v134, %v133
    %v145 = vpack.c.b16 %v136, %v135
    %v146 = vpack.c.b16 %v138, %v137
    %v163 = vunpack.c.l.b16 %v49
    %v164 = vunpack.c.h.b16 %v49
    %v165 = vunpack.c.l.b16 %v50
    %v166 = vunpack.c.h.b16 %v50
    %v167 = vunpack.c.l.b16 %v51
    %v168 = vunpack.c.h.b16 %v51
    %v169 = vunpack.c.l.b16 %v52
    %v170 = vunpack.c.h.b16 %v52
    %v171 = vunpack.c.l.b16 %v53
    %v172 = vunpack.c.h.b16 %v53
    %v173 = vunpack.c.l.b16 %v54
    %v174 = vunpack.c.h.b16 %v54
    %v175 = vunpack.c.l.b16 %v55
    %v176 = vunpack.c.h.b16 %v55
    %v177 = vunpack.c.l.b16 %v56
    %v178 = vunpack.c.h.b16 %v56
    %v179 = vunpack.c.l.b16 %v57
    %v180 = vunpack.c.h.b16 %v57
    %v181 = vunpack.c.l.b16 %v58
    %v182 = vunpack.c.h.b16 %v58
    %v183 = vunpack.c.l.b16 %v59
    %v184 = vunpack.c.h.b16 %v59
    %v185 = vunpack.c.l.b16 %v60
    %v186 = vunpack.c.h.b16 %v60
    %v187 = vunpack.c.l.b16 %v61
    %v188 = vunpack.c.h.b16 %v61
    %v189 = vunpack.c.l.b16 %v62
    %v190 = vunpack.c.h.b16 %v62
    %v191 = vunpack.c.l.b16 %v63
    %v192 = vunpack.c.h.b16 %v63
    %v193 = vunpack.c.l.b16 %v64
    %v194 = vunpack.c.h.b16 %v64
    %v195 = vpack.c.b16 %v171, %v163
    %v196 = vpack.c.b16 %v172, %v164
    %v197 = vpack.c.b16 %v173, %v165
    %v198 = vpack.c.b16 %v174, %v166
    %v199 = vpack.c.b16 %v175, %v167
    %v200 = vpack.c.b16 %v176, %v168
    %v201 = vpack.c.b16 %v177, %v169
    %v202 = vpack.c.b16 %v178, %v170
    %v203 = vpack.c.b16 %v187, %v179
    %v204 = vpack.c.b16 %v188, %v180
    %v205 = vpack.c.b16 %v189, %v181
    %v206 = vpack.c.b16 %v190, %v182
    %v207 = vpack.c.b16 %v191, %v183
    %v208 = vpack.c.b16 %v192, %v184
    %v209 = vpack.c.b16 %v193, %v185
    %v210 = vpack.c.b16 %v194, %v186
    %vm227 = vcmask 261120
    %v229 = vsel %vm227, %v139, 0
    %v232 = vsel %vm227, %v140, 0
    %v235 = vsel %vm227, %v141, 0
    %v238 = vsel %vm227, %v142, 0
    %v241 = vsel %vm227, %v143, 0
    %v244 = vsel %vm227, %v144, 0
    %v247 = vsel %vm227, %v145, 0
    %v250 = vsel %vm227, %v146, 0
    %252 = vmatprep.subr.bf16.mxu0 0
    %253 = vmatpush1.bf16.msra.mxu0 0
    %254 = vmatprep.subr.bf16.mxu0 0
    %255 = vmatpush1.bf16.msra.mxu0 0
    %256 = vmatprep.subr.bf16.mxu0 0
    %257 = vmatpush1.bf16.msra.mxu0 0
    %258 = vmatprep.subr.bf16.mxu0 0
    %259 = vmatpush1.bf16.msra.mxu0 0
    %260 = vmatprep.subr.bf16.mxu0 0
    %261 = vmatpush1.bf16.msra.mxu0 0
    %262 = vmatprep.subr.bf16.mxu0 0
    %263 = vmatpush1.bf16.msra.mxu0 0
    %264 = vmatprep.subr.bf16.mxu0 %v204
    %265 = vmatpush1.bf16.msra.mxu0 %v203
    %266 = vmatprep.subr.bf16.mxu0 %v196
    %267 = vmatpush1.bf16.msra.mxu0 %v195
    %268 = vmatprep.subr.bf16.mxu0 0
    %269 = vmatpush2.bf16.msra.mxu0 0
    %270 = vmatprep.subr.bf16.mxu0 0
    %271 = vmatpush2.bf16.msra.mxu0 0
    %272 = vmatprep.subr.bf16.mxu0 0
    %273 = vmatpush2.bf16.msra.mxu0 0
    %274 = vmatprep.subr.bf16.mxu0 0
    %275 = vmatpush2.bf16.msra.mxu0 0
    %276 = vmatprep.subr.bf16.mxu0 0
    %277 = vmatpush2.bf16.msra.mxu0 0
    %278 = vmatprep.subr.bf16.mxu0 0
    %279 = vmatpush2.bf16.msra.mxu0 0
    %280 = vmatprep.subr.bf16.mxu0 0
    %281 = vmatpush2.bf16.msra.mxu0 0
    %282 = vmatprep.subr.bf16.mxu0 0
    %283 = vmatpush2.bf16.msra.mxu0 0
    %284 = vmatprep.mubr.bf16.mxu0 0
    %285 = vmatmul.mubr.bf16.gmra.mxu0 %v229
    %v286 = vpop.f32.mrf.mxu0
    %v287 = vadd.f32 %v70, %v286
    %v288 = vpop.f32.mrf.mxu0
    %v289 = vadd.f32 %v74, %v288
    %v290 = vpop.f32.mrf.mxu0
    %v291 = vadd.f32 %v70, %v290
    %v292 = vpop.f32.mrf.mxu0
    %v293 = vadd.f32 %v74, %v292
    %294 = vmatprep.mubr.bf16.mxu0 0
    %295 = vmatmul.mubr.bf16.gmra.mxu0 %v232
    %v296 = vpop.f32.mrf.mxu0
    %v297 = vadd.f32 %v70, %v296
    %v298 = vpop.f32.mrf.mxu0
    %v299 = vadd.f32 %v74, %v298
    %v300 = vpop.f32.mrf.mxu0
    %v301 = vadd.f32 %v70, %v300
    %v302 = vpop.f32.mrf.mxu0
    %v303 = vadd.f32 %v74, %v302
    %304 = vmatprep.mubr.bf16.mxu0 0
    %305 = vmatmul.mubr.bf16.gmra.mxu0 %v235
    %v306 = vpop.f32.mrf.mxu0
    %v307 = vadd.f32 %v70, %v306
    %v308 = vpop.f32.mrf.mxu0
    %v309 = vadd.f32 %v74, %v308
    %v310 = vpop.f32.mrf.mxu0
    %v311 = vadd.f32 %v70, %v310
    %v312 = vpop.f32.mrf.mxu0
    %v313 = vadd.f32 %v74, %v312
    %314 = vmatprep.mubr.bf16.mxu0 0
    %315 = vmatmul.mubr.bf16.gmra.mxu0 %v238
    %v316 = vpop.f32.mrf.mxu0
    %v317 = vadd.f32 %v70, %v316
    %v318 = vpop.f32.mrf.mxu0
    %v319 = vadd.f32 %v74, %v318
    %v320 = vpop.f32.mrf.mxu0
    %v321 = vadd.f32 %v70, %v320
    %v322 = vpop.f32.mrf.mxu0
    %v323 = vadd.f32 %v74, %v322
    %324 = vmatprep.mubr.bf16.mxu0 0
    %325 = vmatmul.mubr.bf16.gmra.mxu0 %v241
    %v326 = vpop.f32.mrf.mxu0
    %v327 = vadd.f32 %v70, %v326
    %v328 = vpop.f32.mrf.mxu0
    %v329 = vadd.f32 %v74, %v328
    %v330 = vpop.f32.mrf.mxu0
    %v331 = vadd.f32 %v70, %v330
    %v332 = vpop.f32.mrf.mxu0
    %v333 = vadd.f32 %v74, %v332
    %334 = vmatprep.mubr.bf16.mxu0 0
    %335 = vmatmul.mubr.bf16.gmra.mxu0 %v244
    %v336 = vpop.f32.mrf.mxu0
    %v337 = vadd.f32 %v70, %v336
    %v338 = vpop.f32.mrf.mxu0
    %v339 = vadd.f32 %v74, %v338
    %v340 = vpop.f32.mrf.mxu0
    %v341 = vadd.f32 %v70, %v340
    %v342 = vpop.f32.mrf.mxu0
    %v343 = vadd.f32 %v74, %v342
    %344 = vmatprep.mubr.bf16.mxu0 0
    %345 = vmatmul.mubr.bf16.gmra.mxu0 %v247
    %v346 = vpop.f32.mrf.mxu0
    %v347 = vadd.f32 %v70, %v346
    %v348 = vpop.f32.mrf.mxu0
    %v349 = vadd.f32 %v74, %v348
    %v350 = vpop.f32.mrf.mxu0
    %v351 = vadd.f32 %v70, %v350
    %v352 = vpop.f32.mrf.mxu0
    %v353 = vadd.f32 %v74, %v352
    %354 = vmatprep.mubr.bf16.mxu0 0
    %355 = vmatmul.mubr.bf16.gmra.mxu0 %v250
    %v356 = vpop.f32.mrf.mxu0
    %v357 = vadd.f32 %v70, %v356
    %v358 = vpop.f32.mrf.mxu0
    %v359 = vadd.f32 %v74, %v358
    %v360 = vpop.f32.mrf.mxu0
    %v361 = vadd.f32 %v70, %v360
    %v362 = vpop.f32.mrf.mxu0
    %v363 = vadd.f32 %v74, %v362
    %364 = vdwg.mxu0
    %365 = vmatprep.subr.bf16.mxu0 0
    %366 = vmatpush1.bf16.msra.mxu0 0
    %367 = vmatprep.subr.bf16.mxu0 0
    %368 = vmatpush1.bf16.msra.mxu0 0
    %369 = vmatprep.subr.bf16.mxu0 0
    %370 = vmatpush1.bf16.msra.mxu0 0
    %371 = vmatprep.subr.bf16.mxu0 0
    %372 = vmatpush1.bf16.msra.mxu0 0
    %373 = vmatprep.subr.bf16.mxu0 0
    %374 = vmatpush1.bf16.msra.mxu0 0
    %375 = vmatprep.subr.bf16.mxu0 0
    %376 = vmatpush1.bf16.msra.mxu0 0
    %377 = vmatprep.subr.bf16.mxu0 %v206
    %378 = vmatpush1.bf16.msra.mxu0 %v205
    %379 = vmatprep.subr.bf16.mxu0 %v198
    %380 = vmatpush1.bf16.msra.mxu0 %v197
    %381 = vmatprep.subr.bf16.mxu0 0
    %382 = vmatpush2.bf16.msra.mxu0 0
    %383 = vmatprep.subr.bf16.mxu0 0
    %384 = vmatpush2.bf16.msra.mxu0 0
    %385 = vmatprep.subr.bf16.mxu0 0
    %386 = vmatpush2.bf16.msra.mxu0 0
    %387 = vmatprep.subr.bf16.mxu0 0
    %388 = vmatpush2.bf16.msra.mxu0 0
    %389 = vmatprep.subr.bf16.mxu0 0
    %390 = vmatpush2.bf16.msra.mxu0 0
    %391 = vmatprep.subr.bf16.mxu0 0
    %392 = vmatpush2.bf16.msra.mxu0 0
    %393 = vmatprep.subr.bf16.mxu0 0
    %394 = vmatpush2.bf16.msra.mxu0 0
    %395 = vmatprep.subr.bf16.mxu0 0
    %396 = vmatpush2.bf16.msra.mxu0 0
    %397 = vmatprep.mubr.bf16.mxu0 0
    %398 = vmatmul.mubr.bf16.gmra.mxu0 %v229
    %v399 = vpop.f32.mrf.mxu0
    %v400 = vadd.f32 %v78, %v399
    %v401 = vpop.f32.mrf.mxu0
    %v402 = vadd.f32 %v82, %v401
    %v403 = vpop.f32.mrf.mxu0
    %v404 = vadd.f32 %v78, %v403
    %v405 = vpop.f32.mrf.mxu0
    %v406 = vadd.f32 %v82, %v405
    %407 = vmatprep.mubr.bf16.mxu0 0
    %408 = vmatmul.mubr.bf16.gmra.mxu0 %v232
    %v409 = vpop.f32.mrf.mxu0
    %v410 = vadd.f32 %v78, %v409
    %v411 = vpop.f32.mrf.mxu0
    %v412 = vadd.f32 %v82, %v411
    %v413 = vpop.f32.mrf.mxu0
    %v414 = vadd.f32 %v78, %v413
    %v415 = vpop.f32.mrf.mxu0
    %v416 = vadd.f32 %v82, %v415
    %417 = vmatprep.mubr.bf16.mxu0 0
    %418 = vmatmul.mubr.bf16.gmra.mxu0 %v235
    %v419 = vpop.f32.mrf.mxu0
    %v420 = vadd.f32 %v78, %v419
    %v421 = vpop.f32.mrf.mxu0
    %v422 = vadd.f32 %v82, %v421
    %v423 = vpop.f32.mrf.mxu0
    %v424 = vadd.f32 %v78, %v423
    %v425 = vpop.f32.mrf.mxu0
    %v426 = vadd.f32 %v82, %v425
    %427 = vmatprep.mubr.bf16.mxu0 0
    %428 = vmatmul.mubr.bf16.gmra.mxu0 %v238
    %v429 = vpop.f32.mrf.mxu0
    %v430 = vadd.f32 %v78, %v429
    %v431 = vpop.f32.mrf.mxu0
    %v432 = vadd.f32 %v82, %v431
    %v433 = vpop.f32.mrf.mxu0
    %v434 = vadd.f32 %v78, %v433
    %v435 = vpop.f32.mrf.mxu0
    %v436 = vadd.f32 %v82, %v435
    %437 = vmatprep.mubr.bf16.mxu0 0
    %438 = vmatmul.mubr.bf16.gmra.mxu0 %v241
    %v439 = vpop.f32.mrf.mxu0
    %v440 = vadd.f32 %v78, %v439
    %v441 = vpop.f32.mrf.mxu0
    %v442 = vadd.f32 %v82, %v441
    %v443 = vpop.f32.mrf.mxu0
    %v444 = vadd.f32 %v78, %v443
    %v445 = vpop.f32.mrf.mxu0
    %v446 = vadd.f32 %v82, %v445
    %447 = vmatprep.mubr.bf16.mxu0 0
    %448 = vmatmul.mubr.bf16.gmra.mxu0 %v244
    %v449 = vpop.f32.mrf.mxu0
    %v450 = vadd.f32 %v78, %v449
    %v451 = vpop.f32.mrf.mxu0
    %v452 = vadd.f32 %v82, %v451
    %v453 = vpop.f32.mrf.mxu0
    %v454 = vadd.f32 %v78, %v453
    %v455 = vpop.f32.mrf.mxu0
    %v456 = vadd.f32 %v82, %v455
    %457 = vmatprep.mubr.bf16.mxu0 0
    %458 = vmatmul.mubr.bf16.gmra.mxu0 %v247
    %v459 = vpop.f32.mrf.mxu0
    %v460 = vadd.f32 %v78, %v459
    %v461 = vpop.f32.mrf.mxu0
    %v462 = vadd.f32 %v82, %v461
    %v463 = vpop.f32.mrf.mxu0
    %v464 = vadd.f32 %v78, %v463
    %v465 = vpop.f32.mrf.mxu0
    %v466 = vadd.f32 %v82, %v465
    %467 = vmatprep.mubr.bf16.mxu0 0
    %468 = vmatmul.mubr.bf16.gmra.mxu0 %v250
    %v469 = vpop.f32.mrf.mxu0
    %v470 = vadd.f32 %v78, %v469
    %v471 = vpop.f32.mrf.mxu0
    %v472 = vadd.f32 %v82, %v471
    %v473 = vpop.f32.mrf.mxu0
    %v474 = vadd.f32 %v78, %v473
    %v475 = vpop.f32.mrf.mxu0
    %v476 = vadd.f32 %v82, %v475
    %477 = vdwg.mxu0
    %478 = vmatprep.subr.bf16.mxu0 0
    %479 = vmatpush1.bf16.msra.mxu0 0
    %480 = vmatprep.subr.bf16.mxu0 0
    %481 = vmatpush1.bf16.msra.mxu0 0
    %482 = vmatprep.subr.bf16.mxu0 0
    %483 = vmatpush1.bf16.msra.mxu0 0
    %484 = vmatprep.subr.bf16.mxu0 0
    %485 = vmatpush1.bf16.msra.mxu0 0
    %486 = vmatprep.subr.bf16.mxu0 0
    %487 = vmatpush1.bf16.msra.mxu0 0
    %488 = vmatprep.subr.bf16.mxu0 0
    %489 = vmatpush1.bf16.msra.mxu0 0
    %490 = vmatprep.subr.bf16.mxu0 %v208
    %491 = vmatpush1.bf16.msra.mxu0 %v207
    %492 = vmatprep.subr.bf16.mxu0 %v200
    %493 = vmatpush1.bf16.msra.mxu0 %v199
    %494 = vmatprep.subr.bf16.mxu0 0
    %495 = vmatpush2.bf16.msra.mxu0 0
    %496 = vmatprep.subr.bf16.mxu0 0
    %497 = vmatpush2.bf16.msra.mxu0 0
    %498 = vmatprep.subr.bf16.mxu0 0
    %499 = vmatpush2.bf16.msra.mxu0 0
    %500 = vmatprep.subr.bf16.mxu0 0
    %501 = vmatpush2.bf16.msra.mxu0 0
    %502 = vmatprep.subr.bf16.mxu0 0
    %503 = vmatpush2.bf16.msra.mxu0 0
    %504 = vmatprep.subr.bf16.mxu0 0
    %505 = vmatpush2.bf16.msra.mxu0 0
    %506 = vmatprep.subr.bf16.mxu0 0
    %507 = vmatpush2.bf16.msra.mxu0 0
    %508 = vmatprep.subr.bf16.mxu0 0
    %509 = vmatpush2.bf16.msra.mxu0 0
    %510 = vmatprep.mubr.bf16.mxu0 0
    %511 = vmatmul.mubr.bf16.gmra.mxu0 %v229
    %v512 = vpop.f32.mrf.mxu0
    %v513 = vadd.f32 %v86, %v512
    %v514 = vpop.f32.mrf.mxu0
    %v515 = vadd.f32 %v90, %v514
    %v516 = vpop.f32.mrf.mxu0
    %v517 = vadd.f32 %v86, %v516
    %v518 = vpop.f32.mrf.mxu0
    %v519 = vadd.f32 %v90, %v518
    %520 = vmatprep.mubr.bf16.mxu0 0
    %521 = vmatmul.mubr.bf16.gmra.mxu0 %v232
    %v522 = vpop.f32.mrf.mxu0
    %v523 = vadd.f32 %v86, %v522
    %v524 = vpop.f32.mrf.mxu0
    %v525 = vadd.f32 %v90, %v524
    %v526 = vpop.f32.mrf.mxu0
    %v527 = vadd.f32 %v86, %v526
    %v528 = vpop.f32.mrf.mxu0
    %v529 = vadd.f32 %v90, %v528
    %530 = vmatprep.mubr.bf16.mxu0 0
    %531 = vmatmul.mubr.bf16.gmra.mxu0 %v235
    %v532 = vpop.f32.mrf.mxu0
    %v533 = vadd.f32 %v86, %v532
    %v534 = vpop.f32.mrf.mxu0
    %v535 = vadd.f32 %v90, %v534
    %v536 = vpop.f32.mrf.mxu0
    %v537 = vadd.f32 %v86, %v536
    %v538 = vpop.f32.mrf.mxu0
    %v539 = vadd.f32 %v90, %v538
    %540 = vmatprep.mubr.bf16.mxu0 0
    %541 = vmatmul.mubr.bf16.gmra.mxu0 %v238
    %v542 = vpop.f32.mrf.mxu0
    %v543 = vadd.f32 %v86, %v542
    %v544 = vpop.f32.mrf.mxu0
    %v545 = vadd.f32 %v90, %v544
    %v546 = vpop.f32.mrf.mxu0
    %v547 = vadd.f32 %v86, %v546
    %v548 = vpop.f32.mrf.mxu0
    %v549 = vadd.f32 %v90, %v548
    %550 = vmatprep.mubr.bf16.mxu0 0
    %551 = vmatmul.mubr.bf16.gmra.mxu0 %v241
    %v552 = vpop.f32.mrf.mxu0
    %v553 = vadd.f32 %v86, %v552
    %v554 = vpop.f32.mrf.mxu0
    %v555 = vadd.f32 %v90, %v554
    %v556 = vpop.f32.mrf.mxu0
    %v557 = vadd.f32 %v86, %v556
    %v558 = vpop.f32.mrf.mxu0
    %v559 = vadd.f32 %v90, %v558
    %560 = vmatprep.mubr.bf16.mxu0 0
    %561 = vmatmul.mubr.bf16.gmra.mxu0 %v244
    %v562 = vpop.f32.mrf.mxu0
    %v563 = vadd.f32 %v86, %v562
    %v564 = vpop.f32.mrf.mxu0
    %v565 = vadd.f32 %v90, %v564
    %v566 = vpop.f32.mrf.mxu0
    %v567 = vadd.f32 %v86, %v566
    %v568 = vpop.f32.mrf.mxu0
    %v569 = vadd.f32 %v90, %v568
    %570 = vmatprep.mubr.bf16.mxu0 0
    %571 = vmatmul.mubr.bf16.gmra.mxu0 %v247
    %v572 = vpop.f32.mrf.mxu0
    %v573 = vadd.f32 %v86, %v572
    %v574 = vpop.f32.mrf.mxu0
    %v575 = vadd.f32 %v90, %v574
    %v576 = vpop.f32.mrf.mxu0
    %v577 = vadd.f32 %v86, %v576
    %v578 = vpop.f32.mrf.mxu0
    %v579 = vadd.f32 %v90, %v578
    %580 = vmatprep.mubr.bf16.mxu0 0
    %581 = vmatmul.mubr.bf16.gmra.mxu0 %v250
    %v582 = vpop.f32.mrf.mxu0
    %v583 = vadd.f32 %v86, %v582
    %v584 = vpop.f32.mrf.mxu0
    %v585 = vadd.f32 %v90, %v584
    %v586 = vpop.f32.mrf.mxu0
    %v587 = vadd.f32 %v86, %v586
    %v588 = vpop.f32.mrf.mxu0
    %v589 = vadd.f32 %v90, %v588
    %590 = vdwg.mxu0
    %591 = vmatprep.subr.bf16.mxu0 0
    %592 = vmatpush1.bf16.msra.mxu0 0
    %593 = vmatprep.subr.bf16.mxu0 0
    %594 = vmatpush1.bf16.msra.mxu0 0
    %595 = vmatprep.subr.bf16.mxu0 0
    %596 = vmatpush1.bf16.msra.mxu0 0
    %597 = vmatprep.subr.bf16.mxu0 0
    %598 = vmatpush1.bf16.msra.mxu0 0
    %599 = vmatprep.subr.bf16.mxu0 0
    %600 = vmatpush1.bf16.msra.mxu0 0
    %601 = vmatprep.subr.bf16.mxu0 0
    %602 = vmatpush1.bf16.msra.mxu0 0
    %603 = vmatprep.subr.bf16.mxu0 %v210
    %604 = vmatpush1.bf16.msra.mxu0 %v209
    %605 = vmatprep.subr.bf16.mxu0 %v202
    %606 = vmatpush1.bf16.msra.mxu0 %v201
    %607 = vmatprep.subr.bf16.mxu0 0
    %608 = vmatpush2.bf16.msra.mxu0 0
    %609 = vmatprep.subr.bf16.mxu0 0
    %610 = vmatpush2.bf16.msra.mxu0 0
    %611 = vmatprep.subr.bf16.mxu0 0
    %612 = vmatpush2.bf16.msra.mxu0 0
    %613 = vmatprep.subr.bf16.mxu0 0
    %614 = vmatpush2.bf16.msra.mxu0 0
    %615 = vmatprep.subr.bf16.mxu0 0
    %616 = vmatpush2.bf16.msra.mxu0 0
    %617 = vmatprep.subr.bf16.mxu0 0
    %618 = vmatpush2.bf16.msra.mxu0 0
    %619 = vmatprep.subr.bf16.mxu0 0
    %620 = vmatpush2.bf16.msra.mxu0 0
    %621 = vmatprep.subr.bf16.mxu0 0
    %622 = vmatpush2.bf16.msra.mxu0 0
    %623 = vmatprep.mubr.bf16.mxu0 0
    %624 = vmatmul.mubr.bf16.gmra.mxu0 %v229
    %v625 = vpop.f32.mrf.mxu0
    %v626 = vadd.f32 %v94, %v625
    %v627 = vpop.f32.mrf.mxu0
    %v628 = vadd.f32 %v98, %v627
    %v629 = vpop.f32.mrf.mxu0
    %v630 = vadd.f32 %v94, %v629
    %v631 = vpop.f32.mrf.mxu0
    %v632 = vadd.f32 %v98, %v631
    %633 = vmatprep.mubr.bf16.mxu0 0
    %634 = vmatmul.mubr.bf16.gmra.mxu0 %v232
    %v635 = vpop.f32.mrf.mxu0
    %v636 = vadd.f32 %v94, %v635
    %v637 = vpop.f32.mrf.mxu0
    %v638 = vadd.f32 %v98, %v637
    %v639 = vpop.f32.mrf.mxu0
    %v640 = vadd.f32 %v94, %v639
    %v641 = vpop.f32.mrf.mxu0
    %v642 = vadd.f32 %v98, %v641
    %643 = vmatprep.mubr.bf16.mxu0 0
    %644 = vmatmul.mubr.bf16.gmra.mxu0 %v235
    %v645 = vpop.f32.mrf.mxu0
    %v646 = vadd.f32 %v94, %v645
    %v647 = vpop.f32.mrf.mxu0
    %v648 = vadd.f32 %v98, %v647
    %v649 = vpop.f32.mrf.mxu0
    %v650 = vadd.f32 %v94, %v649
    %v651 = vpop.f32.mrf.mxu0
    %v652 = vadd.f32 %v98, %v651
    %653 = vmatprep.mubr.bf16.mxu0 0
    %654 = vmatmul.mubr.bf16.gmra.mxu0 %v238
    %v655 = vpop.f32.mrf.mxu0
    %v656 = vadd.f32 %v94, %v655
    %v657 = vpop.f32.mrf.mxu0
    %v658 = vadd.f32 %v98, %v657
    %v659 = vpop.f32.mrf.mxu0
    %v660 = vadd.f32 %v94, %v659
    %v661 = vpop.f32.mrf.mxu0
    %v662 = vadd.f32 %v98, %v661
    %663 = vmatprep.mubr.bf16.mxu0 0
    %664 = vmatmul.mubr.bf16.gmra.mxu0 %v241
    %v665 = vpop.f32.mrf.mxu0
    %v666 = vadd.f32 %v94, %v665
    %v667 = vpop.f32.mrf.mxu0
    %v668 = vadd.f32 %v98, %v667
    %v669 = vpop.f32.mrf.mxu0
    %v670 = vadd.f32 %v94, %v669
    %v671 = vpop.f32.mrf.mxu0
    %v672 = vadd.f32 %v98, %v671
    %673 = vmatprep.mubr.bf16.mxu0 0
    %674 = vmatmul.mubr.bf16.gmra.mxu0 %v244
    %v675 = vpop.f32.mrf.mxu0
    %v676 = vadd.f32 %v94, %v675
    %v677 = vpop.f32.mrf.mxu0
    %v678 = vadd.f32 %v98, %v677
    %v679 = vpop.f32.mrf.mxu0
    %v680 = vadd.f32 %v94, %v679
    %v681 = vpop.f32.mrf.mxu0
    %v682 = vadd.f32 %v98, %v681
    %683 = vmatprep.mubr.bf16.mxu0 0
    %684 = vmatmul.mubr.bf16.gmra.mxu0 %v247
    %v685 = vpop.f32.mrf.mxu0
    %v686 = vadd.f32 %v94, %v685
    %v687 = vpop.f32.mrf.mxu0
    %v688 = vadd.f32 %v98, %v687
    %v689 = vpop.f32.mrf.mxu0
    %v690 = vadd.f32 %v94, %v689
    %v691 = vpop.f32.mrf.mxu0
    %v692 = vadd.f32 %v98, %v691
    %693 = vmatprep.mubr.bf16.mxu0 0
    %694 = vmatmul.mubr.bf16.gmra.mxu0 %v250
    %v695 = vpop.f32.mrf.mxu0
    %v696 = vadd.f32 %v94, %v695
    %v697 = vpop.f32.mrf.mxu0
    %v698 = vadd.f32 %v98, %v697
    %v699 = vpop.f32.mrf.mxu0
    %v700 = vadd.f32 %v94, %v699
    %v701 = vpop.f32.mrf.mxu0
    %v702 = vadd.f32 %v98, %v701
    %703 = vdwg.mxu0
    %v704 = vpack.c.bf16 %v291, %v287
    %v705 = vpack.c.bf16 %v293, %v289
    %v706 = vpack.c.bf16 %v404, %v400
    %v707 = vpack.c.bf16 %v406, %v402
    %v708 = vpack.c.bf16 %v301, %v297
    %v709 = vpack.c.bf16 %v303, %v299
    %v710 = vpack.c.bf16 %v414, %v410
    %v711 = vpack.c.bf16 %v416, %v412
    %v712 = vpack.c.bf16 %v311, %v307
    %v713 = vpack.c.bf16 %v313, %v309
    %v714 = vpack.c.bf16 %v424, %v420
    %v715 = vpack.c.bf16 %v426, %v422
    %v716 = vpack.c.bf16 %v321, %v317
    %v717 = vpack.c.bf16 %v323, %v319
    %v718 = vpack.c.bf16 %v434, %v430
    %v719 = vpack.c.bf16 %v436, %v432
    %v720 = vpack.c.bf16 %v331, %v327
    %v721 = vpack.c.bf16 %v333, %v329
    %v722 = vpack.c.bf16 %v444, %v440
    %v723 = vpack.c.bf16 %v446, %v442
    %v724 = vpack.c.bf16 %v341, %v337
    %v725 = vpack.c.bf16 %v343, %v339
    %v726 = vpack.c.bf16 %v454, %v450
    %v727 = vpack.c.bf16 %v456, %v452
    %v728 = vpack.c.bf16 %v351, %v347
    %v729 = vpack.c.bf16 %v353, %v349
    %v730 = vpack.c.bf16 %v464, %v460
    %v731 = vpack.c.bf16 %v466, %v462
    %v732 = vpack.c.bf16 %v361, %v357
    %v733 = vpack.c.bf16 %v363, %v359
    %v734 = vpack.c.bf16 %v474, %v470
    %v735 = vpack.c.bf16 %v476, %v472
    %v768 = vunpack.c.l.b16 %v704
    %v769 = vunpack.c.l.b16 %v705
    %v770 = vunpack.c.l.b16 %v706
    %v771 = vunpack.c.l.b16 %v707
    %v772 = vunpack.c.h.b16 %v704
    %v773 = vunpack.c.h.b16 %v705
    %v774 = vunpack.c.h.b16 %v706
    %v775 = vunpack.c.h.b16 %v707
    %v776 = vunpack.c.l.b16 %v708
    %v777 = vunpack.c.l.b16 %v709
    %v778 = vunpack.c.l.b16 %v710
    %v779 = vunpack.c.l.b16 %v711
    %v780 = vunpack.c.h.b16 %v708
    %v781 = vunpack.c.h.b16 %v709
    %v782 = vunpack.c.h.b16 %v710
    %v783 = vunpack.c.h.b16 %v711
    %v784 = vunpack.c.l.b16 %v712
    %v785 = vunpack.c.l.b16 %v713
    %v786 = vunpack.c.l.b16 %v714
    %v787 = vunpack.c.l.b16 %v715
    %v788 = vunpack.c.h.b16 %v712
    %v789 = vunpack.c.h.b16 %v713
    %v790 = vunpack.c.h.b16 %v714
    %v791 = vunpack.c.h.b16 %v715
    %v792 = vunpack.c.l.b16 %v716
    %v793 = vunpack.c.l.b16 %v717
    %v794 = vunpack.c.l.b16 %v718
    %v795 = vunpack.c.l.b16 %v719
    %v796 = vunpack.c.h.b16 %v716
    %v797 = vunpack.c.h.b16 %v717
    %v798 = vunpack.c.h.b16 %v718
    %v799 = vunpack.c.h.b16 %v719
    %v800 = vunpack.c.l.b16 %v720
    %v801 = vunpack.c.l.b16 %v721
    %v802 = vunpack.c.l.b16 %v722
    %v803 = vunpack.c.l.b16 %v723
    %v804 = vunpack.c.h.b16 %v720
    %v805 = vunpack.c.h.b16 %v721
    %v806 = vunpack.c.h.b16 %v722
    %v807 = vunpack.c.h.b16 %v723
    %v808 = vunpack.c.l.b16 %v724
    %v809 = vunpack.c.l.b16 %v725
    %v810 = vunpack.c.l.b16 %v726
    %v811 = vunpack.c.l.b16 %v727
    %v812 = vunpack.c.h.b16 %v724
    %v813 = vunpack.c.h.b16 %v725
    %v814 = vunpack.c.h.b16 %v726
    %v815 = vunpack.c.h.b16 %v727
    %v816 = vunpack.c.l.b16 %v728
    %v817 = vunpack.c.l.b16 %v729
    %v818 = vunpack.c.l.b16 %v730
    %v819 = vunpack.c.l.b16 %v731
    %v820 = vunpack.c.h.b16 %v728
    %v821 = vunpack.c.h.b16 %v729
    %v822 = vunpack.c.h.b16 %v730
    %v823 = vunpack.c.h.b16 %v731
    %v824 = vunpack.c.l.b16 %v732
    %v825 = vunpack.c.l.b16 %v733
    %v826 = vunpack.c.l.b16 %v734
    %v827 = vunpack.c.l.b16 %v735
    %v828 = vunpack.c.h.b16 %v732
    %v829 = vunpack.c.h.b16 %v733
    %v830 = vunpack.c.h.b16 %v734
    %v831 = vunpack.c.h.b16 %v735
    %v832 = vpack.c.b16 %v769, %v768
    %v833 = vpack.c.b16 %v771, %v770
    %v834 = vpack.c.b16 %v773, %v772
    %v835 = vpack.c.b16 %v775, %v774
    %v836 = vpack.c.b16 %v777, %v776
    %v837 = vpack.c.b16 %v779, %v778
    %v838 = vpack.c.b16 %v781, %v780
    %v839 = vpack.c.b16 %v783, %v782
    %v840 = vpack.c.b16 %v785, %v784
    %v841 = vpack.c.b16 %v787, %v786
    %v842 = vpack.c.b16 %v789, %v788
    %v843 = vpack.c.b16 %v791, %v790
    %v844 = vpack.c.b16 %v793, %v792
    %v845 = vpack.c.b16 %v795, %v794
    %v846 = vpack.c.b16 %v797, %v796
    %v847 = vpack.c.b16 %v799, %v798
    %v848 = vpack.c.b16 %v801, %v800
    %v849 = vpack.c.b16 %v803, %v802
    %v850 = vpack.c.b16 %v805, %v804
    %v851 = vpack.c.b16 %v807, %v806
    %v852 = vpack.c.b16 %v809, %v808
    %v853 = vpack.c.b16 %v811, %v810
    %v854 = vpack.c.b16 %v813, %v812
    %v855 = vpack.c.b16 %v815, %v814
    %v856 = vpack.c.b16 %v817, %v816
    %v857 = vpack.c.b16 %v819, %v818
    %v858 = vpack.c.b16 %v821, %v820
    %v859 = vpack.c.b16 %v823, %v822
    %v860 = vpack.c.b16 %v825, %v824
    %v861 = vpack.c.b16 %v827, %v826
    %v862 = vpack.c.b16 %v829, %v828
    %v863 = vpack.c.b16 %v831, %v830
    %896 = vst [vmem:[#allocation5] sm:$0xff] %v832
    %897 = vst [vmem:[#allocation5 + $0x8] sm:$0xff] %v833
    %898 = vst [vmem:[#allocation5 + $0x10] sm:$0xff] %v834
    %899 = vst [vmem:[#allocation5 + $0x18] sm:$0xff] %v835
    %900 = vst [vmem:[#allocation5 + $0x20] sm:$0xff] %v836
    %901 = vst [vmem:[#allocation5 + $0x28] sm:$0xff] %v837
    %902 = vst [vmem:[#allocation5 + $0x30] sm:$0xff] %v838
    %903 = vst [vmem:[#allocation5 + $0x38] sm:$0xff] %v839
    %904 = vst [vmem:[#allocation5 + $0x40] sm:$0xff] %v840
    %905 = vst [vmem:[#allocation5 + $0x48] sm:$0xff] %v841
    %906 = vst [vmem:[#allocation5 + $0x50] sm:$0xff] %v842
    %907 = vst [vmem:[#allocation5 + $0x58] sm:$0xff] %v843
    %908 = vst [vmem:[#allocation5 + $0x60] sm:$0xff] %v844
    %909 = vst [vmem:[#allocation5 + $0x68] sm:$0xff] %v845
    %910 = vst [vmem:[#allocation5 + $0x70] sm:$0xff] %v846
    %911 = vst [vmem:[#allocation5 + $0x78] sm:$0xff] %v847
    %912 = vst [vmem:[#allocation5 + $0x80] sm:$0xff] %v848
    %913 = vst [vmem:[#allocation5 + $0x88] sm:$0xff] %v849
    %914 = vst [vmem:[#allocation5 + $0x90] sm:$0xff] %v850
    %915 = vst [vmem:[#allocation5 + $0x98] sm:$0xff] %v851
    %916 = vst [vmem:[#allocation5 + $0xa0] sm:$0xff] %v852
    %917 = vst [vmem:[#allocation5 + $0xa8] sm:$0xff] %v853
    %918 = vst [vmem:[#allocation5 + $0xb0] sm:$0xff] %v854
    %919 = vst [vmem:[#allocation5 + $0xb8] sm:$0xff] %v855
    %920 = vst [vmem:[#allocation5 + $0xc0] sm:$0xff] %v856
    %921 = vst [vmem:[#allocation5 + $0xc8] sm:$0xff] %v857
    %922 = vst [vmem:[#allocation5 + $0xd0] sm:$0xff] %v858
    %923 = vst [vmem:[#allocation5 + $0xd8] sm:$0xff] %v859
    %924 = vst [vmem:[#allocation5 + $0xe0] sm:$0xff] %v860
    %925 = vst [vmem:[#allocation5 + $0xe8] sm:$0xff] %v861
    %926 = vst [vmem:[#allocation5 + $0xf0] sm:$0xff] %v862
    %927 = vst [vmem:[#allocation5 + $0xf8] sm:$0xff] %v863
    %v928 = vpack.c.bf16 %v517, %v513
    %v929 = vpack.c.bf16 %v519, %v515
    %v930 = vpack.c.bf16 %v630, %v626
    %v931 = vpack.c.bf16 %v632, %v628
    %v932 = vpack.c.bf16 %v527, %v523
    %v933 = vpack.c.bf16 %v529, %v525
    %v934 = vpack.c.bf16 %v640, %v636
    %v935 = vpack.c.bf16 %v642, %v638
    %v936 = vpack.c.bf16 %v537, %v533
    %v937 = vpack.c.bf16 %v539, %v535
    %v938 = vpack.c.bf16 %v650, %v646
    %v939 = vpack.c.bf16 %v652, %v648
    %v940 = vpack.c.bf16 %v547, %v543
    %v941 = vpack.c.bf16 %v549, %v545
    %v942 = vpack.c.bf16 %v660, %v656
    %v943 = vpack.c.bf16 %v662, %v658
    %v944 = vpack.c.bf16 %v557, %v553
    %v945 = vpack.c.bf16 %v559, %v555
    %v946 = vpack.c.bf16 %v670, %v666
    %v947 = vpack.c.bf16 %v672, %v668
    %v948 = vpack.c.bf16 %v567, %v563
    %v949 = vpack.c.bf16 %v569, %v565
    %v950 = vpack.c.bf16 %v680, %v676
    %v951 = vpack.c.bf16 %v682, %v678
    %v952 = vpack.c.bf16 %v577, %v573
    %v953 = vpack.c.bf16 %v579, %v575
    %v954 = vpack.c.bf16 %v690, %v686
    %v955 = vpack.c.bf16 %v692, %v688
    %v956 = vpack.c.bf16 %v587, %v583
    %v957 = vpack.c.bf16 %v589, %v585
    %v958 = vpack.c.bf16 %v700, %v696
    %v959 = vpack.c.bf16 %v702, %v698
    %v992 = vunpack.c.l.b16 %v928
    %v993 = vunpack.c.l.b16 %v929
    %v994 = vunpack.c.l.b16 %v930
    %v995 = vunpack.c.l.b16 %v931
    %v996 = vunpack.c.h.b16 %v928
    %v997 = vunpack.c.h.b16 %v929
    %v998 = vunpack.c.h.b16 %v930
    %v999 = vunpack.c.h.b16 %v931
    %v1000 = vunpack.c.l.b16 %v932
    %v1001 = vunpack.c.l.b16 %v933
    %v1002 = vunpack.c.l.b16 %v934
    %v1003 = vunpack.c.l.b16 %v935
    %v1004 = vunpack.c.h.b16 %v932
    %v1005 = vunpack.c.h.b16 %v933
    %v1006 = vunpack.c.h.b16 %v934
    %v1007 = vunpack.c.h.b16 %v935
    %v1008 = vunpack.c.l.b16 %v936
    %v1009 = vunpack.c.l.b16 %v937
    %v1010 = vunpack.c.l.b16 %v938
    %v1011 = vunpack.c.l.b16 %v939
    %v1012 = vunpack.c.h.b16 %v936
    %v1013 = vunpack.c.h.b16 %v937
    %v1014 = vunpack.c.h.b16 %v938
    %v1015 = vunpack.c.h.b16 %v939
    %v1016 = vunpack.c.l.b16 %v940
    %v1017 = vunpack.c.l.b16 %v941
    %v1018 = vunpack.c.l.b16 %v942
    %v1019 = vunpack.c.l.b16 %v943
    %v1020 = vunpack.c.h.b16 %v940
    %v1021 = vunpack.c.h.b16 %v941
    %v1022 = vunpack.c.h.b16 %v942
    %v1023 = vunpack.c.h.b16 %v943
    %v1024 = vunpack.c.l.b16 %v944
    %v1025 = vunpack.c.l.b16 %v945
    %v1026 = vunpack.c.l.b16 %v946
    %v1027 = vunpack.c.l.b16 %v947
    %v1028 = vunpack.c.h.b16 %v944
    %v1029 = vunpack.c.h.b16 %v945
    %v1030 = vunpack.c.h.b16 %v946
    %v1031 = vunpack.c.h.b16 %v947
    %v1032 = vunpack.c.l.b16 %v948
    %v1033 = vunpack.c.l.b16 %v949
    %v1034 = vunpack.c.l.b16 %v950
    %v1035 = vunpack.c.l.b16 %v951
    %v1036 = vunpack.c.h.b16 %v948
    %v1037 = vunpack.c.h.b16 %v949
    %v1038 = vunpack.c.h.b16 %v950
    %v1039 = vunpack.c.h.b16 %v951
    %v1040 = vunpack.c.l.b16 %v952
    %v1041 = vunpack.c.l.b16 %v953
    %v1042 = vunpack.c.l.b16 %v954
    %v1043 = vunpack.c.l.b16 %v955
    %v1044 = vunpack.c.h.b16 %v952
    %v1045 = vunpack.c.h.b16 %v953
    %v1046 = vunpack.c.h.b16 %v954
    %v1047 = vunpack.c.h.b16 %v955
    %v1048 = vunpack.c.l.b16 %v956
    %v1049 = vunpack.c.l.b16 %v957
    %v1050 = vunpack.c.l.b16 %v958
    %v1051 = vunpack.c.l.b16 %v959
    %v1052 = vunpack.c.h.b16 %v956
    %v1053 = vunpack.c.h.b16 %v957
    %v1054 = vunpack.c.h.b16 %v958
    %v1055 = vunpack.c.h.b16 %v959
    %v1056 = vpack.c.b16 %v993, %v992
    %v1057 = vpack.c.b16 %v995, %v994
    %v1058 = vpack.c.b16 %v997, %v996
    %v1059 = vpack.c.b16 %v999, %v998
    %v1060 = vpack.c.b16 %v1001, %v1000
    %v1061 = vpack.c.b16 %v1003, %v1002
    %v1062 = vpack.c.b16 %v1005, %v1004
    %v1063 = vpack.c.b16 %v1007, %v1006
    %v1064 = vpack.c.b16 %v1009, %v1008
    %v1065 = vpack.c.b16 %v1011, %v1010
    %v1066 = vpack.c.b16 %v1013, %v1012
    %v1067 = vpack.c.b16 %v1015, %v1014
    %v1068 = vpack.c.b16 %v1017, %v1016
    %v1069 = vpack.c.b16 %v1019, %v1018
    %v1070 = vpack.c.b16 %v1021, %v1020
    %v1071 = vpack.c.b16 %v1023, %v1022
    %v1072 = vpack.c.b16 %v1025, %v1024
    %v1073 = vpack.c.b16 %v1027, %v1026
    %v1074 = vpack.c.b16 %v1029, %v1028
    %v1075 = vpack.c.b16 %v1031, %v1030
    %v1076 = vpack.c.b16 %v1033, %v1032
    %v1077 = vpack.c.b16 %v1035, %v1034
    %v1078 = vpack.c.b16 %v1037, %v1036
    %v1079 = vpack.c.b16 %v1039, %v1038
    %v1080 = vpack.c.b16 %v1041, %v1040
    %v1081 = vpack.c.b16 %v1043, %v1042
    %v1082 = vpack.c.b16 %v1045, %v1044
    %v1083 = vpack.c.b16 %v1047, %v1046
    %v1084 = vpack.c.b16 %v1049, %v1048
    %v1085 = vpack.c.b16 %v1051, %v1050
    %v1086 = vpack.c.b16 %v1053, %v1052
    %v1087 = vpack.c.b16 %v1055, %v1054
    %1120 = vst [vmem:[#allocation6] sm:$0xff] %v1056
    %1121 = vst [vmem:[#allocation6 + $0x8] sm:$0xff] %v1057
    %1122 = vst [vmem:[#allocation6 + $0x10] sm:$0xff] %v1058
    %1123 = vst [vmem:[#allocation6 + $0x18] sm:$0xff] %v1059
    %1124 = vst [vmem:[#allocation6 + $0x20] sm:$0xff] %v1060
    %1125 = vst [vmem:[#allocation6 + $0x28] sm:$0xff] %v1061
    %1126 = vst [vmem:[#allocation6 + $0x30] sm:$0xff] %v1062
    %1127 = vst [vmem:[#allocation6 + $0x38] sm:$0xff] %v1063
    %1128 = vst [vmem:[#allocation6 + $0x40] sm:$0xff] %v1064
    %1129 = vst [vmem:[#allocation6 + $0x48] sm:$0xff] %v1065
    %1130 = vst [vmem:[#allocation6 + $0x50] sm:$0xff] %v1066
    %1131 = vst [vmem:[#allocation6 + $0x58] sm:$0xff] %v1067
    %1132 = vst [vmem:[#allocation6 + $0x60] sm:$0xff] %v1068
    %1133 = vst [vmem:[#allocation6 + $0x68] sm:$0xff] %v1069
    %1134 = vst [vmem:[#allocation6 + $0x70] sm:$0xff] %v1070
    %1135 = vst [vmem:[#allocation6 + $0x78] sm:$0xff] %v1071
    %1136 = vst [vmem:[#allocation6 + $0x80] sm:$0xff] %v1072
    %1137 = vst [vmem:[#allocation6 + $0x88] sm:$0xff] %v1073
    %1138 = vst [vmem:[#allocation6 + $0x90] sm:$0xff] %v1074
    %1139 = vst [vmem:[#allocation6 + $0x98] sm:$0xff] %v1075
    %1140 = vst [vmem:[#allocation6 + $0xa0] sm:$0xff] %v1076
    %1141 = vst [vmem:[#allocation6 + $0xa8] sm:$0xff] %v1077
    %1142 = vst [vmem:[#allocation6 + $0xb0] sm:$0xff] %v1078
    %1143 = vst [vmem:[#allocation6 + $0xb8] sm:$0xff] %v1079
    %1144 = vst [vmem:[#allocation6 + $0xc0] sm:$0xff] %v1080
    %1145 = vst [vmem:[#allocation6 + $0xc8] sm:$0xff] %v1081
    %1146 = vst [vmem:[#allocation6 + $0xd0] sm:$0xff] %v1082
    %1147 = vst [vmem:[#allocation6 + $0xd8] sm:$0xff] %v1083
    %1148 = vst [vmem:[#allocation6 + $0xe0] sm:$0xff] %v1084
    %1149 = vst [vmem:[#allocation6 + $0xe8] sm:$0xff] %v1085
    %1150 = vst [vmem:[#allocation6 + $0xf0] sm:$0xff] %v1086
    %1151 = vst [vmem:[#allocation6 + $0xf8] sm:$0xff] %v1087
    // Predicated region
    $region18: #{tpu_custom_call.1} parent=1 // pred_check
      _
    $region19: #{tpu_custom_call.1} parent=1 // pred_check_branch
      %1153 = sbr.rel (0) target = $region21
    $region20: #{tpu_custom_call.1} parent=1 // pred_region
      %s1155 = ssub.s32 4096, 4096
      %1156 = vsyncadd [#allocation4], %s1155
      %s1157 = sshll.u32 [#allocation5], 4
      %s1158 = int_to_ptr.vmem [resolvable:$true] %s1157
      %1163 = dma.vmem_to_hbm [thread:$0]  %s1158, 4096, %s3, [#allocation4], 256, 256, 16
    $region21: #{tpu_custom_call.1} parent=1 // pred_fallthru
      _
    // Predicated region
    $region22: #{tpu_custom_call.1} parent=1 // pred_check
      _
    $region23: #{tpu_custom_call.1} parent=1 // pred_check_branch
      %1165 = sbr.rel (0) target = $region25
    $region24: #{tpu_custom_call.1} parent=1 // pred_region
      %s1167 = ssub.s32 4096, 4096
      %1168 = vsyncadd [#allocation7], %s1167
      %s1169 = sshll.u32 [#allocation6], 4
      %s1170 = int_to_ptr.vmem [resolvable:$true] %s1169
      %1175 = dma.vmem_to_hbm [thread:$0]  %s1170, 4096, %s4, [#allocation7], 256, 256, 16
    $region25: #{tpu_custom_call.1} parent=1 // pred_fallthru
      _
    // Predicated region
    $region26: #{tpu_custom_call.1} parent=1 // pred_check
      _
    $region27: #{tpu_custom_call.1} parent=1 // pred_check_branch
      %1177 = sbr.rel (0) target = $region29
    $region28: #{tpu_custom_call.1} parent=1 // pred_region
      %1178 = dma.done [#allocation4], 4096
    $region29: #{tpu_custom_call.1} parent=1 // pred_fallthru
      _
    // Predicated region
    $region30: #{tpu_custom_call.1} parent=1 // pred_check
      _
    $region31: #{tpu_custom_call.1} parent=1 // pred_check_branch
      %1180 = sbr.rel (0) target = $region33
    $region32: #{tpu_custom_call.1} parent=1 // pred_region
      %1181 = dma.done [#allocation7], 4096
    $region33: #{tpu_custom_call.1} parent=1 // pred_fallthru
      _
    %1182 = vsyncpa [#allocation3], 1
    %1183 = vsyncpa [#allocation4], 1
    %1184 = vsyncpa [#allocation7], 1

</llo_original>
